<compile_context>
chip_gen: v6e
topology: v6e:2x2x1
jax: 0.10.0
libtpu: 0.0.40
codegen_flags: <defaults>
</compile_context>

<pallas_src>
import functools

import jax
import jax.numpy as jnp
from jax.experimental import pallas as pl
from jax.experimental.pallas import tpu as pltpu


def _round_up(n, m):
    return ((n + m - 1) // m) * m


def dqn_kernel(x_ref, w1_ref, b1_ref, w2_ref, b2_ref, w3_ref, b3_ref, out_ref):
    # Fused 3-layer MLP on one batch tile, entirely in VMEM.
    # Matmuls run on the MXU with f32 accumulation; bias/ReLU stay f32 on the
    # VPU (v5e has no bf16 VPU).  The x cast to the matmul dtype happens here
    # instead of as a separate XLA op in the wrapper.
    x = x_ref[...].astype(w1_ref.dtype)
    h1 = jnp.dot(x, w1_ref[...], preferred_element_type=jnp.float32) + b1_ref[...]
    h1 = jnp.maximum(h1, 0.0)
    h2 = jnp.dot(h1.astype(w2_ref.dtype), w2_ref[...],
                 preferred_element_type=jnp.float32) + b2_ref[...]
    h2 = jnp.maximum(h2, 0.0)
    y = jnp.dot(h2.astype(w3_ref.dtype), w3_ref[...],
                preferred_element_type=jnp.float32) + b3_ref[...]
    out_ref[...] = y.astype(out_ref.dtype)


def prepare_params(w1, b1, w2, b2, w3, b3, matmul_dtype=jnp.bfloat16, lane_pad=128):
    """One-time parameter prep (do NOT call per forward):
    - weights stored as (in_features, out_features) and cast to the matmul dtype,
    - biases kept in f32 (added after f32 accumulation),
    - final layer zero-padded to a multiple of 128 output features so the
      output store is lane-dense."""
    A = w3.shape[1]
    A_pad = _round_up(A, lane_pad)
    if A_pad != A:
        w3 = jnp.pad(w3, ((0, 0), (0, A_pad - A)))
        b3 = jnp.pad(b3, ((0, 0), (0, A_pad - A)))
    return (
        w1.astype(matmul_dtype), b1.astype(jnp.float32),
        w2.astype(matmul_dtype), b2.astype(jnp.float32),
        w3.astype(matmul_dtype), b3.astype(jnp.float32),
    )


@functools.partial(jax.jit, static_argnames=("action_size", "block_b", "out_dtype"))
def dqn_forward(x, params, action_size, block_b=512, out_dtype=jnp.float32):
    """x: (B, state_size) f32.  params: output of prepare_params.
    Returns (B, action_size) Q-values in out_dtype (default f32)."""
    w1, b1, w2, b2, w3, b3 = params
    B, S = x.shape
    H1 = w1.shape[1]
    H2 = w2.shape[1]
    A_pad = w3.shape[1]

    # Balanced batch tiling: minimize pad rows, 16-row multiples (bf16 sublane
    # packing), and force >=2 grid steps for B >= 256 so both v7x TensorCores
    # get a shard of the replay batch.
    steps = max(1, -(-B // block_b))
    if B >= 256 and steps < 2:
        steps = 2
    bb = _round_up(-(-B // steps), 16)
    Bp = bb * steps
    if Bp != B:
        x = jnp.pad(x, ((0, Bp - B), (0, 0)))

    out = pl.pallas_call(
        dqn_kernel,
        out_shape=jax.ShapeDtypeStruct((Bp, A_pad), out_dtype),
        grid_spec=pl.GridSpec(
            grid=(steps,),
            in_specs=[
                pl.BlockSpec((bb, S), lambda i: (i, 0)),      # x batch tile (f32)
                pl.BlockSpec((S, H1), lambda i: (0, 0)),      # W1 (whole, resident)
                pl.BlockSpec((1, H1), lambda i: (0, 0)),      # b1
                pl.BlockSpec((H1, H2), lambda i: (0, 0)),     # W2
                pl.BlockSpec((1, H2), lambda i: (0, 0)),      # b2
                pl.BlockSpec((H2, A_pad), lambda i: (0, 0)),  # W3 (lane-padded)
                pl.BlockSpec((1, A_pad), lambda i: (0, 0)),   # b3 (lane-padded)
            ],
            out_specs=pl.BlockSpec((bb, A_pad), lambda i: (i, 0)),
        ),
        compiler_params=pltpu.CompilerParams(
            dimension_semantics=("parallel",),
        ),
    )(x, w1, b1, w2, b2, w3, b3)

    # Drop batch padding and padded action lanes.  Downstream reductions
    # (argmax/max over actions) may instead consume the padded output directly
    # to skip this slice (padded action lanes are exactly zero).
    return out[:B, :action_size]


def init_linear(key, fan_in, fan_out, dtype=jnp.float32):
    # Deterministic init mimicking nn.Linear's U(-1/sqrt(fan_in), 1/sqrt(fan_in)).
    kw, kb = jax.random.split(key)
    bound = 1.0 / jnp.sqrt(jnp.asarray(fan_in, dtype))
    # Stored as (in, out) so the kernel computes x @ W (== x @ W_pt.T).
    w = jax.random.uniform(kw, (fan_in, fan_out), dtype, minval=-bound, maxval=bound)
    b = jax.random.uniform(kb, (1, fan_out), dtype, minval=-bound, maxval=bound)
    return w, b


def reference_forward(x, params):
    w1, b1, w2, b2, w3, b3 = params
    h1 = jnp.maximum(x @ w1 + b1, 0.0)
    h2 = jnp.maximum(h1 @ w2 + b2, 0.0)
    return h2 @ w3 + b3


if __name__ == "__main__":
    state_size = 16
    action_size = 4
    batch = 8

    root = jax.random.PRNGKey(0)
    kx, kx2, k1, k2, k3 = jax.random.split(root, 5)

    x = jax.random.normal(kx, (batch, state_size), jnp.float32)
    w1, b1 = init_linear(k1, state_size, 128)
    w2, b2 = init_linear(k2, 128, 128)
    w3, b3 = init_linear(k3, 128, action_size)
    raw_params = (w1, b1, w2, b2, w3, b3)

    ref = reference_forward(x, raw_params)

    # Exact-precision path (f32 matmuls, f32 output) -- tight check vs. reference.
    p_f32 = prepare_params(*raw_params, matmul_dtype=jnp.float32)
    out_f32 = jax.block_until_ready(dqn_forward(x, p_f32, action_size))
    assert out_f32.shape == (batch, action_size)
    assert jnp.allclose(out_f32, ref, atol=1e-5, rtol=1e-5)

    # Performance path (bf16 matmul inputs, f32 accumulation) -- looser tolerance.
    p_bf16 = prepare_params(*raw_params, matmul_dtype=jnp.bfloat16)
    out_bf16 = jax.block_until_ready(dqn_forward(x, p_bf16, action_size))
    assert out_bf16.shape == (batch, action_size)
    assert jnp.allclose(out_bf16, ref, atol=5e-2, rtol=5e-2)

    # Awkward "replay batch" size exercising balanced tiling + multi-step grid
    # (B=260 -> 2 steps of 144 rows) and the bf16 output-writeback option.
    big_b = 260
    xb = jax.random.normal(kx2, (big_b, state_size), jnp.float32)
    ref_b = reference_forward(xb, raw_params)
    out_b = jax.block_until_ready(
        dqn_forward(xb, p_bf16, action_size, out_dtype=jnp.bfloat16))
    assert out_b.shape == (big_b, action_size)
    assert jnp.allclose(out_b.astype(jnp.float32), ref_b, atol=1e-1, rtol=1e-1)

    print("KERNEL_OK")
</pallas_src>

<mosaic_0001>
module attributes {stable_mosaic.version = 11 : i64} {
  func.func @dqn_kernel(%arg0: i32, %arg1: memref<16x16xf32, #tpu.memory_space<vmem>>, %arg2: memref<16x128xf32, #tpu.memory_space<vmem>>, %arg3: memref<1x128xf32, #tpu.memory_space<vmem>>, %arg4: memref<128x128xf32, #tpu.memory_space<vmem>>, %arg5: memref<1x128xf32, #tpu.memory_space<vmem>>, %arg6: memref<128x128xf32, #tpu.memory_space<vmem>>, %arg7: memref<1x128xf32, #tpu.memory_space<vmem>>, %arg8: memref<16x128xf32, #tpu.memory_space<vmem>>) attributes {dimension_semantics = [#tpu.dimension_semantics<parallel>], iteration_bounds = array<i64: 1>, scalar_prefetch = 0 : i64, scratch_operands = 0 : i64, tpu.core_type = #tpu.core_type<tc>, window_params = [{transform_indices = @transform_0, window_bounds = array<i64: 16, 16>}, {pipeline_mode = #tpu.pipeline_mode<synchronous>, transform_indices = @transform_1, window_bounds = array<i64: 16, 128>}, {pipeline_mode = #tpu.pipeline_mode<synchronous>, transform_indices = @transform_2, window_bounds = array<i64: 1, 128>}, {pipeline_mode = #tpu.pipeline_mode<synchronous>, transform_indices = @transform_3, window_bounds = array<i64: 128, 128>}, {pipeline_mode = #tpu.pipeline_mode<synchronous>, transform_indices = @transform_4, window_bounds = array<i64: 1, 128>}, {pipeline_mode = #tpu.pipeline_mode<synchronous>, transform_indices = @transform_5, window_bounds = array<i64: 128, 128>}, {pipeline_mode = #tpu.pipeline_mode<synchronous>, transform_indices = @transform_6, window_bounds = array<i64: 1, 128>}, {transform_indices = @transform_7, window_bounds = array<i64: 16, 128>}]} {
    %c0 = arith.constant 0 : index
    %c0_0 = arith.constant 0 : index
    %0 = vector.load %arg1[%c0, %c0_0] : memref<16x16xf32, #tpu.memory_space<vmem>>, vector<16x16xf32>
    %c0_1 = arith.constant 0 : index
    %c0_2 = arith.constant 0 : index
    %1 = vector.load %arg2[%c0_1, %c0_2] : memref<16x128xf32, #tpu.memory_space<vmem>>, vector<16x128xf32>
    %cst = arith.constant dense<0.000000e+00> : vector<16x128xf32>
    %2 = tpu.matmul %0, %1, %cst {dimension_numbers = #tpu.dot_dimension_numbers<[1], [0], [0], [1], [0, 0, 1, 1], [], []>} : vector<16x16xf32>, vector<16x128xf32>, vector<16x128xf32> -> vector<16x128xf32>
    %c0_3 = arith.constant 0 : index
    %c0_4 = arith.constant 0 : index
    %3 = vector.load %arg3[%c0_3, %c0_4] : memref<1x128xf32, #tpu.memory_space<vmem>>, vector<1x128xf32>
    %4 = vector.broadcast %3 : vector<1x128xf32> to vector<16x128xf32>
    %5 = arith.addf %2, %4 : vector<16x128xf32>
    %cst_5 = arith.constant 0.000000e+00 : f32
    %6 = vector.broadcast %cst_5 : f32 to vector<16x128xf32>
    %7 = arith.maximumf %5, %6 : vector<16x128xf32>
    %c0_6 = arith.constant 0 : index
    %c0_7 = arith.constant 0 : index
    %8 = vector.load %arg4[%c0_6, %c0_7] : memref<128x128xf32, #tpu.memory_space<vmem>>, vector<128x128xf32>
    %cst_8 = arith.constant dense<0.000000e+00> : vector<16x128xf32>
    %9 = tpu.matmul %7, %8, %cst_8 {dimension_numbers = #tpu.dot_dimension_numbers<[1], [0], [0], [1], [0, 0, 1, 1], [], []>} : vector<16x128xf32>, vector<128x128xf32>, vector<16x128xf32> -> vector<16x128xf32>
    %c0_9 = arith.constant 0 : index
    %c0_10 = arith.constant 0 : index
    %10 = vector.load %arg5[%c0_9, %c0_10] : memref<1x128xf32, #tpu.memory_space<vmem>>, vector<1x128xf32>
    %11 = vector.broadcast %10 : vector<1x128xf32> to vector<16x128xf32>
    %12 = arith.addf %9, %11 : vector<16x128xf32>
    %cst_11 = arith.constant 0.000000e+00 : f32
    %13 = vector.broadcast %cst_11 : f32 to vector<16x128xf32>
    %14 = arith.maximumf %12, %13 : vector<16x128xf32>
    %c0_12 = arith.constant 0 : index
    %c0_13 = arith.constant 0 : index
    %15 = vector.load %arg6[%c0_12, %c0_13] : memref<128x128xf32, #tpu.memory_space<vmem>>, vector<128x128xf32>
    %cst_14 = arith.constant dense<0.000000e+00> : vector<16x128xf32>
    %16 = tpu.matmul %14, %15, %cst_14 {dimension_numbers = #tpu.dot_dimension_numbers<[1], [0], [0], [1], [0, 0, 1, 1], [], []>} : vector<16x128xf32>, vector<128x128xf32>, vector<16x128xf32> -> vector<16x128xf32>
    %c0_15 = arith.constant 0 : index
    %c0_16 = arith.constant 0 : index
    %17 = vector.load %arg7[%c0_15, %c0_16] : memref<1x128xf32, #tpu.memory_space<vmem>>, vector<1x128xf32>
    %18 = vector.broadcast %17 : vector<1x128xf32> to vector<16x128xf32>
    %19 = arith.addf %16, %18 : vector<16x128xf32>
    %c0_17 = arith.constant 0 : index
    %c0_18 = arith.constant 0 : index
    %20 = vector.load %arg8[%c0_17, %c0_18] : memref<16x128xf32, #tpu.memory_space<vmem>>, vector<16x128xf32>
    tpu.vector_store %arg8[%c0_17, %c0_18], %19 {strides = array<i32>} : memref<16x128xf32, #tpu.memory_space<vmem>>, vector<16x128xf32>,
    return
  }
  func.func @transform_0(%arg0: i32) -> (i32, i32) {
    %c0_i32 = arith.constant 0 : i32
    %c0_i32_0 = arith.constant 0 : i32
    return %arg0, %c0_i32 : i32, i32
  }
  func.func @transform_1(%arg0: i32) -> (i32, i32) {
    %c0_i32 = arith.constant 0 : i32
    %c0_i32_0 = arith.constant 0 : i32
    %c0_i32_1 = arith.constant 0 : i32
    return %c0_i32, %c0_i32_0 : i32, i32
  }
  func.func @transform_2(%arg0: i32) -> (i32, i32) {
    %c0_i32 = arith.constant 0 : i32
    %c0_i32_0 = arith.constant 0 : i32
    %c0_i32_1 = arith.constant 0 : i32
    return %c0_i32, %c0_i32_0 : i32, i32
  }
  func.func @transform_3(%arg0: i32) -> (i32, i32) {
    %c0_i32 = arith.constant 0 : i32
    %c0_i32_0 = arith.constant 0 : i32
    %c0_i32_1 = arith.constant 0 : i32
    return %c0_i32, %c0_i32_0 : i32, i32
  }
  func.func @transform_4(%arg0: i32) -> (i32, i32) {
    %c0_i32 = arith.constant 0 : i32
    %c0_i32_0 = arith.constant 0 : i32
    %c0_i32_1 = arith.constant 0 : i32
    return %c0_i32, %c0_i32_0 : i32, i32
  }
  func.func @transform_5(%arg0: i32) -> (i32, i32) {
    %c0_i32 = arith.constant 0 : i32
    %c0_i32_0 = arith.constant 0 : i32
    %c0_i32_1 = arith.constant 0 : i32
    return %c0_i32, %c0_i32_0 : i32, i32
  }
  func.func @transform_6(%arg0: i32) -> (i32, i32) {
    %c0_i32 = arith.constant 0 : i32
    %c0_i32_0 = arith.constant 0 : i32
    %c0_i32_1 = arith.constant 0 : i32
    return %c0_i32, %c0_i32_0 : i32, i32
  }
  func.func @transform_7(%arg0: i32) -> (i32, i32) {
    %c0_i32 = arith.constant 0 : i32
    %c0_i32_0 = arith.constant 0 : i32
    return %arg0, %c0_i32 : i32, i32
  }
}

</mosaic_0001>

<llo_original>
// kernel: dqn_forward.1
$region0: #{dqn_forward.1}
  #allocation0 [shape = 'u32[]', space=smem, size = 0x4, offset = 0x4, fixed_abs, tag = 'smem constant byte address 0x4 - core index']
  #allocation1 [shape = 'u32[144,128]{1,0:T(1,128)}', space=vmem, size = 0x12000, scoped, tag = 'internal scratch']
  %s0 = inlined_call_operand.vmem [shape: f32[16,16], index: 0, kind: input, shape index: {}]
  %s1 = inlined_call_operand.vmem [shape: f32[16,128], index: 1, kind: input, shape index: {}]
  %s2 = inlined_call_operand.vmem [shape: f32[1,128], index: 2, kind: input, shape index: {}]
  %s3 = inlined_call_operand.hbm [shape: f32[128,128], index: 3, kind: input, shape index: {}]
  %s4 = inlined_call_operand.vmem [shape: f32[1,128], index: 4, kind: input, shape index: {}]
  %s5 = inlined_call_operand.hbm [shape: f32[128,128], index: 5, kind: input, shape index: {}]
  %s6 = inlined_call_operand.vmem [shape: f32[1,128], index: 6, kind: input, shape index: {}]
  %s7 = inlined_call_operand.vmem [shape: f32[16,128], index: 7, kind: output, shape index: {}]
  %s8 = sld [smem:[#allocation0]]
  $region46: #{dqn_forward.1} parent=0
    _
  %s10 = ssub.s32 1, %s8
  %s11 = scalar_select 0, %s10, %s8
  $region1: #{dqn_forward.1} parent=0
    #allocation2 [shape = 'u8[65536]{0}', space=vmem, size = 0x10000, scoped, tag = 'input window, operand 3, single buffered']
    #allocation3 [shape = 's32[1]{0}', space=sflag, size = 0x4, scoped, tag = 'scoped memory for dqn_forward.1']
    #allocation4 [shape = 'u8[65536]{0}', space=vmem, size = 0x10000, scoped, tag = 'input window, operand 5, single buffered']
    #allocation5 [shape = 's32[1]{0}', space=sflag, size = 0x4, scoped, tag = 'scoped memory for dqn_forward.1']
    %12 = vsyncpa [#allocation3], 0
    %13 = vsyncpa [#allocation5], 0
    // Predicated region
    $region2: #{dqn_forward.1} parent=1 // pred_check
      _
    $region3: #{dqn_forward.1} parent=1 // pred_check_branch
      %15 = sbr.rel (0) target = $region5
    $region4: #{dqn_forward.1} parent=1 // pred_region
      _
    $region5: #{dqn_forward.1} parent=1 // pred_fallthru
      _
    // Predicated region
    $region6: #{dqn_forward.1} parent=1 // pred_check
      _
    $region7: #{dqn_forward.1} parent=1 // pred_check_branch
      %17 = sbr.rel (0) target = $region9
    $region8: #{dqn_forward.1} parent=1 // pred_region
      _
    $region9: #{dqn_forward.1} parent=1 // pred_fallthru
      _
    // Predicated region
    $region10: #{dqn_forward.1} parent=1 // pred_check
      _
    $region11: #{dqn_forward.1} parent=1 // pred_check_branch
      %19 = sbr.rel (0) target = $region13
    $region12: #{dqn_forward.1} parent=1 // pred_region
      _
    $region13: #{dqn_forward.1} parent=1 // pred_fallthru
      _
    // Predicated region
    $region14: #{dqn_forward.1} parent=1 // pred_check
      _
    $region15: #{dqn_forward.1} parent=1 // pred_check_branch
      %21 = sbr.rel (0) target = $region17
    $region16: #{dqn_forward.1} parent=1 // pred_region
      %s23 = ssub.s32 2048, 2048
      %24 = vsyncadd [#allocation3], %s23
      %s25 = sshll.u32 [#allocation2], 4
      %s26 = int_to_ptr.vmem [resolvable:$true] %s25
      %31 = dma.hbm_to_vmem [thread:$0]  %s3, 2048, %s26, [#allocation3], 128, 128, 8
    $region17: #{dqn_forward.1} parent=1 // pred_fallthru
      _
    // Predicated region
    $region18: #{dqn_forward.1} parent=1 // pred_check
      _
    $region19: #{dqn_forward.1} parent=1 // pred_check_branch
      %33 = sbr.rel (0) target = $region21
    $region20: #{dqn_forward.1} parent=1 // pred_region
      _
    $region21: #{dqn_forward.1} parent=1 // pred_fallthru
      _
    // Predicated region
    $region22: #{dqn_forward.1} parent=1 // pred_check
      _
    $region23: #{dqn_forward.1} parent=1 // pred_check_branch
      %35 = sbr.rel (0) target = $region25
    $region24: #{dqn_forward.1} parent=1 // pred_region
      %s37 = ssub.s32 2048, 2048
      %38 = vsyncadd [#allocation5], %s37
      %s39 = sshll.u32 [#allocation4], 4
      %s40 = int_to_ptr.vmem [resolvable:$true] %s39
      %45 = dma.hbm_to_vmem [thread:$0]  %s5, 2048, %s40, [#allocation5], 128, 128, 8
    $region25: #{dqn_forward.1} parent=1 // pred_fallthru
      _
    // Predicated region
    $region26: #{dqn_forward.1} parent=1 // pred_check
      _
    $region27: #{dqn_forward.1} parent=1 // pred_check_branch
      %47 = sbr.rel (0) target = $region29
    $region28: #{dqn_forward.1} parent=1 // pred_region
      _
    $region29: #{dqn_forward.1} parent=1 // pred_fallthru
      _
    // Predicated region
    $region30: #{dqn_forward.1} parent=1 // pred_check
      _
    $region31: #{dqn_forward.1} parent=1 // pred_check_branch
      %49 = sbr.rel (0) target = $region33
    $region32: #{dqn_forward.1} parent=1 // pred_region
      %50 = dma.done [#allocation3], 2048
    $region33: #{dqn_forward.1} parent=1 // pred_fallthru
      _
    // Predicated region
    $region34: #{dqn_forward.1} parent=1 // pred_check
      _
    $region35: #{dqn_forward.1} parent=1 // pred_check_branch
      %52 = sbr.rel (0) target = $region37
    $region36: #{dqn_forward.1} parent=1 // pred_region
      %53 = dma.done [#allocation5], 2048
    $region37: #{dqn_forward.1} parent=1 // pred_fallthru
      _
    %v54 = vld [vmem:[%s0] sm:$0xff]
    %v55 = vld [vmem:[%s0 + $0x8] sm:$0xff]
    %v56 = vld [vmem:[%s1] sm:$0xff]
    %v57 = vld [vmem:[%s1 + $0x8] sm:$0xff]
    %v58 = vld [vmem:[%s2] sm:$0x1]
    %v60 = vlaneseq
    %v61 = vshrl.u32 %v60, 7
    %v62 = vsub.s32 0, %v61
    %v63 = vrot.slane %v58, %v62
    %vm65 = vcmask 130048
    %v67 = vsel %vm65, %v54, 0
    %v70 = vsel %vm65, %v55, 0
    %72 = vmatprep.subr.mxu0 0.0
    %73 = vmatpush1.msra.mxu0 0.0
    %74 = vmatprep.subr.mxu0 0.0
    %75 = vmatpush1.msra.mxu0 0.0
    %76 = vmatprep.subr.mxu0 0.0
    %77 = vmatpush1.msra.mxu0 0.0
    %78 = vmatprep.subr.mxu0 0.0
    %79 = vmatpush1.msra.mxu0 0.0
    %80 = vmatprep.subr.mxu0 0.0
    %81 = vmatpush1.msra.mxu0 0.0
    %82 = vmatprep.subr.mxu0 0.0
    %83 = vmatpush1.msra.mxu0 0.0
    %84 = vmatprep.subr.mxu0 0.0
    %85 = vmatpush1.msra.mxu0 0.0
    %86 = vmatprep.subr.mxu0 0.0
    %87 = vmatpush1.msra.mxu0 0.0
    %88 = vmatprep.subr.mxu0 0.0
    %89 = vmatpush1.msra.mxu0 0.0
    %90 = vmatprep.subr.mxu0 0.0
    %91 = vmatpush1.msra.mxu0 0.0
    %92 = vmatprep.subr.mxu0 0.0
    %93 = vmatpush1.msra.mxu0 0.0
    %94 = vmatprep.subr.mxu0 0.0
    %95 = vmatpush1.msra.mxu0 0.0
    %96 = vmatprep.subr.mxu0 0.0
    %97 = vmatpush1.msra.mxu0 0.0
    %98 = vmatprep.subr.mxu0 0.0
    %99 = vmatpush1.msra.mxu0 0.0
    %100 = vmatprep.subr.mxu0 0.0
    %101 = vmatpush1.msra.mxu0 %v57
    %102 = vmatprep.subr.mxu0 0.0
    %103 = vmatpush1.msra.mxu0 %v56
    %104 = vmatprep.subr.mxu0 0.0
    %105 = vmatpush2.msra.mxu0 0.0
    %106 = vmatprep.subr.mxu0 0.0
    %107 = vmatpush2.msra.mxu0 0.0
    %108 = vmatprep.subr.mxu0 0.0
    %109 = vmatpush2.msra.mxu0 0.0
    %110 = vmatprep.subr.mxu0 0.0
    %111 = vmatpush2.msra.mxu0 0.0
    %112 = vmatprep.subr.mxu0 0.0
    %113 = vmatpush2.msra.mxu0 0.0
    %114 = vmatprep.subr.mxu0 0.0
    %115 = vmatpush2.msra.mxu0 0.0
    %116 = vmatprep.subr.mxu0 0.0
    %117 = vmatpush2.msra.mxu0 0.0
    %118 = vmatprep.subr.mxu0 0.0
    %119 = vmatpush2.msra.mxu0 0.0
    %120 = vmatprep.subr.mxu0 0.0
    %121 = vmatpush2.msra.mxu0 0.0
    %122 = vmatprep.subr.mxu0 0.0
    %123 = vmatpush2.msra.mxu0 0.0
    %124 = vmatprep.subr.mxu0 0.0
    %125 = vmatpush2.msra.mxu0 0.0
    %126 = vmatprep.subr.mxu0 0.0
    %127 = vmatpush2.msra.mxu0 0.0
    %128 = vmatprep.subr.mxu0 0.0
    %129 = vmatpush2.msra.mxu0 0.0
    %130 = vmatprep.subr.mxu0 0.0
    %131 = vmatpush2.msra.mxu0 0.0
    %132 = vmatprep.subr.mxu0 0.0
    %133 = vmatpush2.msra.mxu0 0.0
    %134 = vmatprep.subr.mxu0 0.0
    %135 = vmatpush2.msra.mxu0 0.0
    %136 = vmatprep.mubr.f32.mxu0 0.0
    %137 = vmatmul.mubr.f32.gmra.mxu0 %v67
    %v138 = vpop.f32.mrf.mxu0
    %v139 = vadd.f32 %v63, %v138
    %v140 = vpop.f32.mrf.mxu0
    %141 = vmatprep.mubr.f32.mxu0 0.0
    %142 = vmatmul.mubr.f32.gmra.mxu0 %v70
    %v143 = vpop.f32.mrf.mxu0
    %v144 = vadd.f32 %v63, %v143
    %v145 = vpop.f32.mrf.mxu0
    %146 = vdwg.mxu0
    %v147 = vmax.f32 %v139, 0.0
    %v148 = vmax.f32 %v144, 0.0
    %v149 = vld [vmem:[#allocation2] sm:$0xff]
    %v150 = vld [vmem:[#allocation2 + $0x8] sm:$0xff]
    %v151 = vld [vmem:[#allocation2 + $0x10] sm:$0xff]
    %v152 = vld [vmem:[#allocation2 + $0x18] sm:$0xff]
    %v153 = vld [vmem:[#allocation2 + $0x20] sm:$0xff]
    %v154 = vld [vmem:[#allocation2 + $0x28] sm:$0xff]
    %v155 = vld [vmem:[#allocation2 + $0x30] sm:$0xff]
    %v156 = vld [vmem:[#allocation2 + $0x38] sm:$0xff]
    %v157 = vld [vmem:[#allocation2 + $0x40] sm:$0xff]
    %v158 = vld [vmem:[#allocation2 + $0x48] sm:$0xff]
    %v159 = vld [vmem:[#allocation2 + $0x50] sm:$0xff]
    %v160 = vld [vmem:[#allocation2 + $0x58] sm:$0xff]
    %v161 = vld [vmem:[#allocation2 + $0x60] sm:$0xff]
    %v162 = vld [vmem:[#allocation2 + $0x68] sm:$0xff]
    %v163 = vld [vmem:[#allocation2 + $0x70] sm:$0xff]
    %v164 = vld [vmem:[#allocation2 + $0x78] sm:$0xff]
    %v165 = vld [vmem:[%s4] sm:$0x1]
    %v167 = vlaneseq
    %v168 = vshrl.u32 %v167, 7
    %v169 = vsub.s32 0, %v168
    %v170 = vrot.slane %v165, %v169
    %172 = vmatprep.subr.mxu0 0.0
    %173 = vmatpush1.msra.mxu0 %v164
    %174 = vmatprep.subr.mxu0 0.0
    %175 = vmatpush1.msra.mxu0 %v163
    %176 = vmatprep.subr.mxu0 0.0
    %177 = vmatpush1.msra.mxu0 %v162
    %178 = vmatprep.subr.mxu0 0.0
    %179 = vmatpush1.msra.mxu0 %v161
    %180 = vmatprep.subr.mxu0 0.0
    %181 = vmatpush1.msra.mxu0 %v160
    %182 = vmatprep.subr.mxu0 0.0
    %183 = vmatpush1.msra.mxu0 %v159
    %184 = vmatprep.subr.mxu0 0.0
    %185 = vmatpush1.msra.mxu0 %v158
    %186 = vmatprep.subr.mxu0 0.0
    %187 = vmatpush1.msra.mxu0 %v157
    %188 = vmatprep.subr.mxu0 0.0
    %189 = vmatpush1.msra.mxu0 %v156
    %190 = vmatprep.subr.mxu0 0.0
    %191 = vmatpush1.msra.mxu0 %v155
    %192 = vmatprep.subr.mxu0 0.0
    %193 = vmatpush1.msra.mxu0 %v154
    %194 = vmatprep.subr.mxu0 0.0
    %195 = vmatpush1.msra.mxu0 %v153
    %196 = vmatprep.subr.mxu0 0.0
    %197 = vmatpush1.msra.mxu0 %v152
    %198 = vmatprep.subr.mxu0 0.0
    %199 = vmatpush1.msra.mxu0 %v151
    %200 = vmatprep.subr.mxu0 0.0
    %201 = vmatpush1.msra.mxu0 %v150
    %202 = vmatprep.subr.mxu0 0.0
    %203 = vmatpush1.msra.mxu0 %v149
    %204 = vmatprep.subr.mxu0 0.0
    %205 = vmatpush2.msra.mxu0 0.0
    %206 = vmatprep.subr.mxu0 0.0
    %207 = vmatpush2.msra.mxu0 0.0
    %208 = vmatprep.subr.mxu0 0.0
    %209 = vmatpush2.msra.mxu0 0.0
    %210 = vmatprep.subr.mxu0 0.0
    %211 = vmatpush2.msra.mxu0 0.0
    %212 = vmatprep.subr.mxu0 0.0
    %213 = vmatpush2.msra.mxu0 0.0
    %214 = vmatprep.subr.mxu0 0.0
    %215 = vmatpush2.msra.mxu0 0.0
    %216 = vmatprep.subr.mxu0 0.0
    %217 = vmatpush2.msra.mxu0 0.0
    %218 = vmatprep.subr.mxu0 0.0
    %219 = vmatpush2.msra.mxu0 0.0
    %220 = vmatprep.subr.mxu0 0.0
    %221 = vmatpush2.msra.mxu0 0.0
    %222 = vmatprep.subr.mxu0 0.0
    %223 = vmatpush2.msra.mxu0 0.0
    %224 = vmatprep.subr.mxu0 0.0
    %225 = vmatpush2.msra.mxu0 0.0
    %226 = vmatprep.subr.mxu0 0.0
    %227 = vmatpush2.msra.mxu0 0.0
    %228 = vmatprep.subr.mxu0 0.0
    %229 = vmatpush2.msra.mxu0 0.0
    %230 = vmatprep.subr.mxu0 0.0
    %231 = vmatpush2.msra.mxu0 0.0
    %232 = vmatprep.subr.mxu0 0.0
    %233 = vmatpush2.msra.mxu0 0.0
    %234 = vmatprep.subr.mxu0 0.0
    %235 = vmatpush2.msra.mxu0 0.0
    %236 = vmatprep.mubr.f32.mxu0 0.0
    %237 = vmatmul.mubr.f32.gmra.mxu0 %v147
    %v238 = vpop.f32.mrf.mxu0
    %v239 = vadd.f32 %v170, %v238
    %v240 = vpop.f32.mrf.mxu0
    %241 = vmatprep.mubr.f32.mxu0 0.0
    %242 = vmatmul.mubr.f32.gmra.mxu0 %v148
    %v243 = vpop.f32.mrf.mxu0
    %v244 = vadd.f32 %v170, %v243
    %v245 = vpop.f32.mrf.mxu0
    %246 = vdwg.mxu0
    %v247 = vmax.f32 %v239, 0.0
    %v248 = vmax.f32 %v244, 0.0
    %v249 = vld [vmem:[#allocation4] sm:$0xff]
    %v250 = vld [vmem:[#allocation4 + $0x8] sm:$0xff]
    %v251 = vld [vmem:[#allocation4 + $0x10] sm:$0xff]
    %v252 = vld [vmem:[#allocation4 + $0x18] sm:$0xff]
    %v253 = vld [vmem:[#allocation4 + $0x20] sm:$0xff]
    %v254 = vld [vmem:[#allocation4 + $0x28] sm:$0xff]
    %v255 = vld [vmem:[#allocation4 + $0x30] sm:$0xff]
    %v256 = vld [vmem:[#allocation4 + $0x38] sm:$0xff]
    %v257 = vld [vmem:[#allocation4 + $0x40] sm:$0xff]
    %v258 = vld [vmem:[#allocation4 + $0x48] sm:$0xff]
    %v259 = vld [vmem:[#allocation4 + $0x50] sm:$0xff]
    %v260 = vld [vmem:[#allocation4 + $0x58] sm:$0xff]
    %v261 = vld [vmem:[#allocation4 + $0x60] sm:$0xff]
    %v262 = vld [vmem:[#allocation4 + $0x68] sm:$0xff]
    %v263 = vld [vmem:[#allocation4 + $0x70] sm:$0xff]
    %v264 = vld [vmem:[#allocation4 + $0x78] sm:$0xff]
    %v265 = vld [vmem:[%s6] sm:$0x1]
    %v267 = vlaneseq
    %v268 = vshrl.u32 %v267, 7
    %v269 = vsub.s32 0, %v268
    %v270 = vrot.slane %v265, %v269
    %272 = vmatprep.subr.mxu0 0.0
    %273 = vmatpush1.msra.mxu0 %v264
    %274 = vmatprep.subr.mxu0 0.0
    %275 = vmatpush1.msra.mxu0 %v263
    %276 = vmatprep.subr.mxu0 0.0
    %277 = vmatpush1.msra.mxu0 %v262
    %278 = vmatprep.subr.mxu0 0.0
    %279 = vmatpush1.msra.mxu0 %v261
    %280 = vmatprep.subr.mxu0 0.0
    %281 = vmatpush1.msra.mxu0 %v260
    %282 = vmatprep.subr.mxu0 0.0
    %283 = vmatpush1.msra.mxu0 %v259
    %284 = vmatprep.subr.mxu0 0.0
    %285 = vmatpush1.msra.mxu0 %v258
    %286 = vmatprep.subr.mxu0 0.0
    %287 = vmatpush1.msra.mxu0 %v257
    %288 = vmatprep.subr.mxu0 0.0
    %289 = vmatpush1.msra.mxu0 %v256
    %290 = vmatprep.subr.mxu0 0.0
    %291 = vmatpush1.msra.mxu0 %v255
    %292 = vmatprep.subr.mxu0 0.0
    %293 = vmatpush1.msra.mxu0 %v254
    %294 = vmatprep.subr.mxu0 0.0
    %295 = vmatpush1.msra.mxu0 %v253
    %296 = vmatprep.subr.mxu0 0.0
    %297 = vmatpush1.msra.mxu0 %v252
    %298 = vmatprep.subr.mxu0 0.0
    %299 = vmatpush1.msra.mxu0 %v251
    %300 = vmatprep.subr.mxu0 0.0
    %301 = vmatpush1.msra.mxu0 %v250
    %302 = vmatprep.subr.mxu0 0.0
    %303 = vmatpush1.msra.mxu0 %v249
    %304 = vmatprep.subr.mxu0 0.0
    %305 = vmatpush2.msra.mxu0 0.0
    %306 = vmatprep.subr.mxu0 0.0
    %307 = vmatpush2.msra.mxu0 0.0
    %308 = vmatprep.subr.mxu0 0.0
    %309 = vmatpush2.msra.mxu0 0.0
    %310 = vmatprep.subr.mxu0 0.0
    %311 = vmatpush2.msra.mxu0 0.0
    %312 = vmatprep.subr.mxu0 0.0
    %313 = vmatpush2.msra.mxu0 0.0
    %314 = vmatprep.subr.mxu0 0.0
    %315 = vmatpush2.msra.mxu0 0.0
    %316 = vmatprep.subr.mxu0 0.0
    %317 = vmatpush2.msra.mxu0 0.0
    %318 = vmatprep.subr.mxu0 0.0
    %319 = vmatpush2.msra.mxu0 0.0
    %320 = vmatprep.subr.mxu0 0.0
    %321 = vmatpush2.msra.mxu0 0.0
    %322 = vmatprep.subr.mxu0 0.0
    %323 = vmatpush2.msra.mxu0 0.0
    %324 = vmatprep.subr.mxu0 0.0
    %325 = vmatpush2.msra.mxu0 0.0
    %326 = vmatprep.subr.mxu0 0.0
    %327 = vmatpush2.msra.mxu0 0.0
    %328 = vmatprep.subr.mxu0 0.0
    %329 = vmatpush2.msra.mxu0 0.0
    %330 = vmatprep.subr.mxu0 0.0
    %331 = vmatpush2.msra.mxu0 0.0
    %332 = vmatprep.subr.mxu0 0.0
    %333 = vmatpush2.msra.mxu0 0.0
    %334 = vmatprep.subr.mxu0 0.0
    %335 = vmatpush2.msra.mxu0 0.0
    %336 = vmatprep.mubr.f32.mxu0 0.0
    %337 = vmatmul.mubr.f32.gmra.mxu0 %v247
    %v338 = vpop.f32.mrf.mxu0
    %v339 = vadd.f32 %v270, %v338
    %v340 = vpop.f32.mrf.mxu0
    %341 = vmatprep.mubr.f32.mxu0 0.0
    %342 = vmatmul.mubr.f32.gmra.mxu0 %v248
    %v343 = vpop.f32.mrf.mxu0
    %v344 = vadd.f32 %v270, %v343
    %v345 = vpop.f32.mrf.mxu0
    %346 = vdwg.mxu0
    %347 = vst [vmem:[%s7] sm:$0xff] %v339
    %348 = vst [vmem:[%s7 + $0x8] sm:$0xff] %v344
    // Predicated region
    $region38: #{dqn_forward.1} parent=1 // pred_check
      _
    $region39: #{dqn_forward.1} parent=1 // pred_check_branch
      %350 = sbr.rel (0) target = $region41
    $region40: #{dqn_forward.1} parent=1 // pred_region
      _
    $region41: #{dqn_forward.1} parent=1 // pred_fallthru
      _
    // Predicated region
    $region42: #{dqn_forward.1} parent=1 // pred_check
      _
    $region43: #{dqn_forward.1} parent=1 // pred_check_branch
      %352 = sbr.rel (0) target = $region45
    $region44: #{dqn_forward.1} parent=1 // pred_region
      _
    $region45: #{dqn_forward.1} parent=1 // pred_fallthru
      _
    %353 = vsyncpa [#allocation3], 1
    %354 = vsyncpa [#allocation5], 1

</llo_original>
